<compile_context>
chip_gen: v5e
topology: v5e:2x2
jax: 0.10.0
libtpu: 0.0.40
codegen_flags: <defaults>
</compile_context>

<pallas_src>
import functools
import math

import jax
import jax.numpy as jnp
from jax.experimental import pallas as pl
from jax.experimental.pallas import tpu as pltpu


_VMEM_LIMIT = 48 * 1024 * 1024   # within v7x's 64 MiB physical VMEM, fine on v5e/v6e
_NEG_INF = -1.0e30               # padded-class bias -> vanishes in log_softmax


def _round_up(x, m):
    return -(-x // m) * m


# ----------------------------------------------------------------------------
# Kernels
# ----------------------------------------------------------------------------
def _linear_kernel(x_ref, w_ref, o_ref):
    # support1 = x @ W1_pad (row tile); stored bf16 (it is only ever an MXU RHS later).
    o_ref[...] = jnp.dot(
        x_ref[...], w_ref[...], preferred_element_type=jnp.float32
    ).astype(o_ref.dtype)


def _gc1_kernel(alpha_ref, adjs_ref, sup_ref, b1_ref, w2_ref, o_ref, *, n_view):
    # MXU-side view accumulation: sum_v alpha[v] * (adjs[v] @ support1), f32 accumulate.
    sup = sup_ref[...]                                   # bf16 [N_pad, H_pad]
    acc = alpha_ref[0] * jnp.dot(adjs_ref[0], sup, preferred_element_type=jnp.float32)
    for v in range(1, n_view):
        acc = acc + alpha_ref[v] * jnp.dot(
            adjs_ref[v], sup, preferred_element_type=jnp.float32
        )
    h1 = jnp.maximum(acc + b1_ref[...], 0.0)             # relu(gc1); padded H lanes stay 0
    # TODO(synk): training-mode dropout mask (pltpu.prng_*) would be applied to h1 here.
    # Fused second-layer "support": support2 = h1 @ W2_pad (saves an HBM round trip of H1).
    o_ref[...] = jnp.dot(
        h1, w2_ref[...], preferred_element_type=jnp.float32
    ).astype(o_ref.dtype)


def _gc2_kernel(alpha_ref, adjs_ref, sup_ref, b2_ref, o_ref, *, n_view):
    sup = sup_ref[...]                                   # bf16 [N_pad, C_pad]
    acc = alpha_ref[0] * jnp.dot(adjs_ref[0], sup, preferred_element_type=jnp.float32)
    for v in range(1, n_view):
        acc = acc + alpha_ref[v] * jnp.dot(
            adjs_ref[v], sup, preferred_element_type=jnp.float32
        )
    # Padded class lanes carry a -1e30 bias -> they drop out of the softmax; no mask needed.
    logits = acc + b2_ref[...]
    m = jnp.max(logits, axis=1, keepdims=True)
    z = logits - m
    lse = jnp.log(jnp.sum(jnp.exp(z), axis=1, keepdims=True))
    o_ref[...] = z - lse


# ----------------------------------------------------------------------------
# Tiling plan (explicit double-buffered VMEM accounting)
# ----------------------------------------------------------------------------
def _plan_tiles(n, n_view, h_pad, c_pad):
    """Pick (row_tile, n_pad) that fits a conservative VMEM budget on all gens."""
    budget = 40 * 1024 * 1024          # blocks budget; _VMEM_LIMIT adds headroom on top
    wide = max(h_pad, c_pad)
    max_tm = _round_up(n, 128)         # avoid gross over-padding of tiny graphs
    fits = []
    for tm in (512, 256, 128, 64, 32, 16, 8):
        if tm > max_tm:
            continue
        n_pad = _round_up(n, tm)
        fp = (
            2 * n_view * tm * n_pad * 2   # double-buffered bf16 stacked-adj row tiles
            + 2 * n_pad * wide * 2        # resident bf16 support block (x2 buffers)
            + 2 * tm * wide * 4           # f32 output tiles (x2 buffers)
            + 2 * wide * wide * 4         # W2_pad / bias blocks
        )
        if fp <= budget:
            fits.append((tm, n_pad, n_pad // tm))
    if not fits:
        # TODO(synk): for extreme N the resident support block itself would need tiling.
        return 8, _round_up(n, 8)

    def score(c):
        tm, _n_pad, steps = c
        # prefer MXU-friendly tm >= 128, then >= 4 grid steps (pipelining + megacore),
        # then the largest tile.
        return (tm >= 128, min(steps, 4), tm)

    tm, n_pad, _ = max(fits, key=score)
    return tm, n_pad


# ----------------------------------------------------------------------------
# Forward
# ----------------------------------------------------------------------------
def cogcn_forward(x, adjs, alpha, w1, b1, w2, b2):
    """CoGCN forward. x: [N, F], adjs: [n_view, N, N], alpha: [n_view]."""
    n_view, n, _ = adjs.shape
    nfeat = x.shape[1]
    nhid = w1.shape[1]
    nclass = w2.shape[1]
    h_pad = max(128, _round_up(nhid, 128))
    c_pad = max(128, _round_up(nclass, 128))

    tm, n_pad = _plan_tiles(n, n_view, h_pad, c_pad)
    grid = (n_pad // tm,)

    # Wrapper-side padding: lane-dense hidden/class dims, tile-aligned node rows,
    # bf16 adjacency stream (accumulation stays f32 in-kernel).
    x_p = jnp.pad(x, ((0, n_pad - n), (0, 0))).astype(jnp.float32)
    adjs_p = jnp.pad(
        adjs, ((0, 0), (0, n_pad - n), (0, n_pad - n))
    ).astype(jnp.bfloat16)
    w1_p = jnp.pad(w1, ((0, 0), (0, h_pad - nhid)))
    b1_p = jnp.pad(b1.reshape(1, -1), ((0, 0), (0, h_pad - nhid)))
    w2_p = jnp.pad(w2, ((0, h_pad - nhid), (0, c_pad - nclass)))
    b2_p = jnp.pad(
        b2.reshape(1, -1), ((0, 0), (0, c_pad - nclass)), constant_values=_NEG_INF
    )
    alpha = alpha.astype(jnp.float32)

    compiler_params = pltpu.CompilerParams(
        dimension_semantics=("parallel",),
        vmem_limit_bytes=_VMEM_LIMIT,
    )

    # ---- support1 = x @ W1_pad (row-tiled linear, bf16 output) ----
    support1 = pl.pallas_call(
        _linear_kernel,
        out_shape=jax.ShapeDtypeStruct((n_pad, h_pad), jnp.bfloat16),
        grid=grid,
        in_specs=[
            pl.BlockSpec((tm, nfeat), lambda i: (i, 0)),
            pl.BlockSpec((nfeat, h_pad), lambda i: (0, 0)),
        ],
        out_specs=pl.BlockSpec((tm, h_pad), lambda i: (i, 0)),
        compiler_params=compiler_params,
        cost_estimate=pl.CostEstimate(
            flops=2 * n_pad * nfeat * h_pad,
            transcendentals=0,
            bytes_accessed=4 * (n_pad * nfeat + nfeat * h_pad) + 2 * n_pad * h_pad,
        ),
    )(x_p, w1_p)

    # ---- gc1: relu(adj_mix @ support1 + b1), fused with support2 = H1 @ W2_pad ----
    gc1 = functools.partial(_gc1_kernel, n_view=n_view)
    support2 = pl.pallas_call(
        gc1,
        out_shape=jax.ShapeDtypeStruct((n_pad, c_pad), jnp.bfloat16),
        grid=grid,
        in_specs=[
            pl.BlockSpec(memory_space=pltpu.MemorySpace.SMEM),       # alpha [n_view]
            pl.BlockSpec((n_view, tm, n_pad), lambda i: (0, i, 0)),  # stacked adjs (bf16)
            pl.BlockSpec((n_pad, h_pad), lambda i: (0, 0)),          # support1 (bf16)
            pl.BlockSpec((1, h_pad), lambda i: (0, 0)),              # b1
            pl.BlockSpec((h_pad, c_pad), lambda i: (0, 0)),          # W2_pad
        ],
        out_specs=pl.BlockSpec((tm, c_pad), lambda i: (i, 0)),
        compiler_params=compiler_params,
        cost_estimate=pl.CostEstimate(
            flops=2 * n_view * n_pad * n_pad * h_pad + 2 * n_pad * h_pad * c_pad,
            transcendentals=0,
            bytes_accessed=2 * n_view * n_pad * n_pad
            + 2 * (n_pad * h_pad + n_pad * c_pad),
        ),
    )(alpha, adjs_p, support1, b1_p, w2_p)

    # ---- gc2: log_softmax(adj_mix @ support2 + b2) ----
    gc2 = functools.partial(_gc2_kernel, n_view=n_view)
    out_p = pl.pallas_call(
        gc2,
        out_shape=jax.ShapeDtypeStruct((n_pad, c_pad), jnp.float32),
        grid=grid,
        in_specs=[
            pl.BlockSpec(memory_space=pltpu.MemorySpace.SMEM),       # alpha [n_view]
            pl.BlockSpec((n_view, tm, n_pad), lambda i: (0, i, 0)),  # stacked adjs (bf16)
            pl.BlockSpec((n_pad, c_pad), lambda i: (0, 0)),          # support2 (bf16)
            pl.BlockSpec((1, c_pad), lambda i: (0, 0)),              # b2 (-1e30 pads)
        ],
        out_specs=pl.BlockSpec((tm, c_pad), lambda i: (i, 0)),
        compiler_params=compiler_params,
        cost_estimate=pl.CostEstimate(
            flops=2 * n_view * n_pad * n_pad * c_pad,
            transcendentals=n_pad * c_pad,
            bytes_accessed=2 * n_view * n_pad * n_pad
            + 2 * n_pad * c_pad
            + 4 * n_pad * c_pad,
        ),
    )(alpha, adjs_p, support2, b2_p)

    return out_p[:n, :nclass]


def init_params(key, nfeat, nhid, nclass):
    """Deterministic init mirroring MixedGraphConvolution._reset_parameters."""
    k1, k2, k3, k4 = jax.random.split(key, 4)
    stdv1 = 1.0 / math.sqrt(nhid)
    stdv2 = 1.0 / math.sqrt(nclass)
    w1 = jax.random.uniform(k1, (nfeat, nhid), jnp.float32, -stdv1, stdv1)
    b1 = jax.random.uniform(k2, (nhid,), jnp.float32, -stdv1, stdv1)
    w2 = jax.random.uniform(k3, (nhid, nclass), jnp.float32, -stdv2, stdv2)
    b2 = jax.random.uniform(k4, (nclass,), jnp.float32, -stdv2, stdv2)
    return w1, b1, w2, b2


if __name__ == "__main__":
    key = jax.random.PRNGKey(0)
    k_x, k_adj, k_p = jax.random.split(key, 3)

    N = 512          # number of graph nodes (4 row tiles of 128 -> exercises grid/pipeline)
    nfeat = 32       # input features
    nclass = 8       # output classes
    n_view = 3       # number of adjacency views
    nhid = max(nfeat // 1280 * 64, 64)   # = 64, matches CoGCN.__init__

    # Node features
    x = jax.random.normal(k_x, (N, nfeat), jnp.float32)

    # n_view dense, row-normalized adjacencies (synthetic, deterministic). The
    # module mixes them with alpha = softmax(ones/n_view) -> uniform weights.
    adj_keys = jax.random.split(k_adj, n_view)
    adj_list = []
    for k in adj_keys:
        a = jax.random.uniform(k, (N, N), jnp.float32)
        adj_list.append(a / jnp.sum(a, axis=1, keepdims=True))
    adjs = jnp.stack(adj_list, axis=0)                      # [n_view, N, N]
    alpha = jax.nn.softmax(jnp.ones((n_view,), jnp.float32) / n_view)

    w1, b1, w2, b2 = init_params(k_p, nfeat, nhid, nclass)

    out = cogcn_forward(x, adjs, alpha, w1, b1, w2, b2)
    jax.block_until_ready(out)

    # sanity check vs pure-f32 JAX reference; tolerance relaxed for the bf16
    # adjacency/support streaming (accumulation is f32 in-kernel).
    adj_mixed = jnp.einsum("v,vij->ij", alpha, adjs)
    h1 = jax.nn.relu(adj_mixed @ (x @ w1) + b1.reshape(1, -1))
    h2 = adj_mixed @ (h1 @ w2) + b2.reshape(1, -1)
    ref = jax.nn.log_softmax(h2, axis=1)
    assert out.shape == (N, nclass)
    assert jnp.allclose(out, ref, atol=2e-2, rtol=2e-2)

    print("KERNEL_OK")
</pallas_src>

<mosaic_0001>
module attributes {stable_mosaic.version = 11 : i64} {
  func.func @_linear_kernel(%arg0: i32, %arg1: memref<128x32xf32, #tpu.memory_space<vmem>>, %arg2: memref<32x128xf32, #tpu.memory_space<vmem>>, %arg3: memref<128x128xbf16, #tpu.memory_space<vmem>>) attributes {dimension_semantics = [#tpu.dimension_semantics<parallel>], iteration_bounds = array<i64: 4>, scalar_prefetch = 0 : i64, scratch_operands = 0 : i64, tpu.core_type = #tpu.core_type<tc>, window_params = [{transform_indices = @transform_0, window_bounds = array<i64: 128, 32>}, {pipeline_mode = #tpu.pipeline_mode<synchronous>, transform_indices = @transform_1, window_bounds = array<i64: 32, 128>}, {transform_indices = @transform_2, window_bounds = array<i64: 128, 128>}]} {
    %c0 = arith.constant 0 : index
    %c0_0 = arith.constant 0 : index
    %0 = vector.load %arg1[%c0, %c0_0] : memref<128x32xf32, #tpu.memory_space<vmem>>, vector<128x32xf32>
    %c0_1 = arith.constant 0 : index
    %c0_2 = arith.constant 0 : index
    %1 = vector.load %arg2[%c0_1, %c0_2] : memref<32x128xf32, #tpu.memory_space<vmem>>, vector<32x128xf32>
    %cst = arith.constant dense<0.000000e+00> : vector<128x128xf32>
    %2 = tpu.matmul %0, %1, %cst {dimension_numbers = #tpu.dot_dimension_numbers<[1], [0], [0], [1], [0, 0, 1, 1], [], []>} : vector<128x32xf32>, vector<32x128xf32>, vector<128x128xf32> -> vector<128x128xf32>
    %3 = arith.truncf %2 : vector<128x128xf32> to vector<128x128xbf16>
    %c0_3 = arith.constant 0 : index
    %c0_4 = arith.constant 0 : index
    %4 = vector.load %arg3[%c0_3, %c0_4] : memref<128x128xbf16, #tpu.memory_space<vmem>>, vector<128x128xbf16>
    tpu.vector_store %arg3[%c0_3, %c0_4], %3 {strides = array<i32>} : memref<128x128xbf16, #tpu.memory_space<vmem>>, vector<128x128xbf16>,
    return
  }
  func.func @transform_0(%arg0: i32) -> (i32, i32) {
    %c0_i32 = arith.constant 0 : i32
    %c0_i32_0 = arith.constant 0 : i32
    return %arg0, %c0_i32 : i32, i32
  }
  func.func @transform_1(%arg0: i32) -> (i32, i32) {
    %c0_i32 = arith.constant 0 : i32
    %c0_i32_0 = arith.constant 0 : i32
    %c0_i32_1 = arith.constant 0 : i32
    return %c0_i32, %c0_i32_0 : i32, i32
  }
  func.func @transform_2(%arg0: i32) -> (i32, i32) {
    %c0_i32 = arith.constant 0 : i32
    %c0_i32_0 = arith.constant 0 : i32
    return %arg0, %c0_i32 : i32, i32
  }
}

</mosaic_0001>

<llo_original>
// kernel: tpu_custom_call.1
$region0: #{tpu_custom_call.1}
  #allocation0 [shape = 'u32[]', space=smem, size = 0x4, offset = 0x4, fixed_abs, tag = 'smem constant byte address 0x4 - core index']
  #allocation1 [shape = 'u32[72,128]{1,0:T(1,128)}', space=vmem, size = 0x9000, scoped, tag = 'internal scratch']
  %s0 = inlined_call_operand.vmem [shape: f32[512,32], index: 0, kind: input, shape index: {}]
  %s1 = inlined_call_operand.vmem [shape: f32[32,128], index: 1, kind: input, shape index: {}]
  %s2 = inlined_call_operand.hbm [shape: bf16[512,128], index: 2, kind: output, shape index: {}]
  %s3 = sld [smem:[#allocation0]]
  $region41: #{tpu_custom_call.1} parent=0
    _
  %s5 = ssub.s32 1, %s3
  %s6 = scalar_select 0, %s5, %s3
  $region1: #{tpu_custom_call.1} parent=0
    #allocation2 [shape = 'u8[65536]{0}', space=vmem, size = 0x10000, scoped, tag = 'output window, operand 0']
    #allocation3 [shape = 's32[2]{0}', space=sflag, size = 0x8, scoped, tag = 'scoped memory for tpu_custom_call.1']
    %7 = vsyncpa [#allocation3], 0
    %s8 = scalar_lea.sflag [#allocation3], 1
    %9 = vsyncpa %s8, 0
    loop: start=0, step=1, limit=6
    $region2: #{tpu_custom_call.1} parent=1 // loop_pre_header
      _
    $region3: #{tpu_custom_call.1} parent=1 // loop_header
      %s11 = sphi 0, %s15
      %p12 = scmp.ge.s32.totalorder %s11, 6
      %s21 = sphi 0, %s23
      %s24 = sphi 0, %s21
      %s25 = sphi 0, %s24
      %s41 = sphi 0, %s25
      %s45 = sphi 0, %s45
      %s47 = sphi 0, %s45
      %s48 = sphi 0, %s47
      %s62 = sphi 0, %s48
      %s68 = sphi 0, %s70
      %s71 = sphi 0, %s68
      %s72 = sphi 0, %s71
      %s88 = sphi 0, %s72
    $region4: #{tpu_custom_call.1} parent=1 // loop_header_branch
      %14 = sbr.rel (%p12) target = $region8
    $region5: #{tpu_custom_call.1} parent=1 // loop_body
      %s16 = ssub.s32 %s11, 1
      %s17 = ssub.s32 %s11, 2
      %s18 = sadd.s32 %s11, 1
      %s19 = ssub.s32 %s11, %s18
      %p20 = scmp.eq.s32.totalorder %s19, 0
      %s22 = sadd.s32 %s21, 1
      %s23 = scalar_select %p20, %s21, %s22
      %p26 = pneg %p20
      %p27 = scmp.eq.s32.totalorder %s11, 3
      %p28 = por %p26, %p27
      %p29 = scmp.ne.s32.totalorder %s21, %s24
      %p30 = scmp.eq.s32.totalorder %s11, 0
      %p31 = por %p29, %p30
      %p32 = scmp.ne.s32.totalorder %s21, %s24
      %p33 = scmp.eq.s32.totalorder %s16, 3
      %p34 = por %p32, %p33
      %p35 = scmp.ne.s32.totalorder %s24, %s25
      %p36 = scmp.eq.s32.totalorder %s16, 0
      %p37 = por %p35, %p36
      %p38 = scmp.ne.s32.totalorder %s24, %s25
      %p39 = scmp.eq.s32.totalorder %s17, 3
      %p40 = por %p38, %p39
      %p42 = scmp.ne.s32.totalorder %s25, %s41
      %p43 = scmp.eq.s32.totalorder %s17, 0
      %p44 = por %p42, %p43
      %s46 = sadd.s32 %s45, 1
      %p49 = scmp.eq.s32.totalorder %s11, 3
      %p50 = scmp.ne.s32.totalorder %s45, %s47
      %p51 = scmp.eq.s32.totalorder %s11, 0
      %p52 = por %p50, %p51
      %p53 = scmp.ne.s32.totalorder %s45, %s47
      %p54 = scmp.eq.s32.totalorder %s16, 3
      %p55 = por %p53, %p54
      %p56 = scmp.ne.s32.totalorder %s47, %s48
      %p57 = scmp.eq.s32.totalorder %s16, 0
      %p58 = por %p56, %p57
      %p59 = scmp.ne.s32.totalorder %s47, %s48
      %p60 = scmp.eq.s32.totalorder %s17, 3
      %p61 = por %p59, %p60
      %p63 = scmp.ne.s32.totalorder %s48, %s62
      %p64 = scmp.eq.s32.totalorder %s17, 0
      %p65 = por %p63, %p64
      %s66 = ssub.s32 %s11, %s18
      %p67 = scmp.eq.s32.totalorder %s66, 0
      %s69 = sadd.s32 %s68, 1
      %s70 = scalar_select %p67, %s68, %s69
      %p73 = pneg %p67
      %p74 = scmp.eq.s32.totalorder %s11, 3
      %p75 = por %p73, %p74
      %p76 = scmp.ne.s32.totalorder %s68, %s71
      %p77 = scmp.eq.s32.totalorder %s11, 0
      %p78 = por %p76, %p77
      %p79 = scmp.ne.s32.totalorder %s68, %s71
      %p80 = scmp.eq.s32.totalorder %s16, 3
      %p81 = por %p79, %p80
      %p82 = scmp.ne.s32.totalorder %s71, %s72
      %p83 = scmp.eq.s32.totalorder %s16, 0
      %p84 = por %p82, %p83
      %p85 = scmp.ne.s32.totalorder %s71, %s72
      %p86 = scmp.eq.s32.totalorder %s17, 3
      %p87 = por %p85, %p86
      %p89 = scmp.ne.s32.totalorder %s72, %s88
      %p90 = scmp.eq.s32.totalorder %s17, 0
      %p91 = por %p89, %p90
      %p92 = scmp.le.s32.totalorder 1, %s11
      %p93 = scmp.lt.s32.totalorder %s11, 5
      %p94 = pnand %p92, %p93
      %p95 = pneg %p94
      // Predicated region
      $region9: #{tpu_custom_call.1} parent=5 // pred_check
        _
      $region10: #{tpu_custom_call.1} parent=5 // pred_check_branch
        %97 = sbr.rel (%p94) target = $region12
      $region11: #{tpu_custom_call.1} parent=5 // pred_region
        %s98 = ssub.s32 %s11, 1
        // Predicated region
        $region13: #{tpu_custom_call.1} parent=11 // pred_check
          %p99 = pneg %p58
        $region14: #{tpu_custom_call.1} parent=11 // pred_check_branch
          %101 = sbr.rel (%p99) target = $region16
        $region15: #{tpu_custom_call.1} parent=11 // pred_region
          _
        $region16: #{tpu_custom_call.1} parent=11 // pred_fallthru
          _
      $region12: #{tpu_custom_call.1} parent=5 // pred_fallthru
        _
      %p102 = scmp.lt.s32.totalorder %s11, 4
      // Predicated region
      $region17: #{tpu_custom_call.1} parent=5 // pred_check
        %p103 = pneg %p102
      $region18: #{tpu_custom_call.1} parent=5 // pred_check_branch
        %105 = sbr.rel (%p103) target = $region20
      $region19: #{tpu_custom_call.1} parent=5 // pred_region
        // Predicated region
        $region21: #{tpu_custom_call.1} parent=19 // pred_check
          %p106 = pneg %p31
        $region22: #{tpu_custom_call.1} parent=19 // pred_check_branch
          %108 = sbr.rel (%p106) target = $region24
        $region23: #{tpu_custom_call.1} parent=19 // pred_region
          %s109 = smul.u32 16, %s11
          %p110 = scmp.lt.s32.totalorder %s109, 63
          %s111 = scalar_select %p110, %s109, 63
          %s112 = smul.addr %s111, 8
          %s113 = scalar_lea.vmem %s0, %s112
          %s114 = smul.u32 16, %s11
        $region24: #{tpu_custom_call.1} parent=19 // pred_fallthru
          _
      $region20: #{tpu_custom_call.1} parent=5 // pred_fallthru
        _
      %p115 = scmp.le.s32.totalorder 1, %s11
      %p116 = scmp.lt.s32.totalorder %s11, 5
      %p117 = pnand %p115, %p116
      %p118 = pneg %p117
      // Predicated region
      $region25: #{tpu_custom_call.1} parent=5 // pred_check
        _
      $region26: #{tpu_custom_call.1} parent=5 // pred_check_branch
        %120 = sbr.rel (%p117) target = $region28
      $region27: #{tpu_custom_call.1} parent=5 // pred_region
        %s121 = ssub.s32 %s11, 1
        %s122 = smul.u32 16, %s16
        %p123 = scmp.lt.s32.totalorder %s122, 63
        %s124 = scalar_select %p123, %s122, 63
        %s125 = smul.addr %s124, 8
        %s126 = scalar_lea.vmem %s0, %s125
        %p127 = pneg %p37
        %p128 = pneg %p34
        %p129 = pneg %p58
        %p130 = pneg %p55
        %p131 = pneg %p84
        %p132 = pneg %p81
        %s133 = sand.u32 %s71, 1
        %s134 = scalar_lea.sflag [#allocation3], %s133
        %s135 = sand.u32 %s71, 1
        %s136 = smul.addr %s135, 64
        %s137 = scalar_lea.vmem [#allocation2], %s136
        %s138 = smul.u32 16, %s16
        %p139 = scmp.lt.s32.totalorder %s138, 63
        %s140 = scalar_select %p139, %s138, 63
        %s141 = smul.addr %s140, 8
        %s142 = scalar_lea.vmem %s0, %s141
        %s143 = smul.u32 16, %s16
        %s144 = smul.u32 16, %s16
        %v145 = vld [vmem:[%s142] sm:$0xff]
        %v146 = vld [vmem:[%s142 + $0x8] sm:$0xff]
        %v147 = vld [vmem:[%s142 + $0x10] sm:$0xff]
        %v148 = vld [vmem:[%s142 + $0x18] sm:$0xff]
        %v149 = vld [vmem:[%s142 + $0x20] sm:$0xff]
        %v150 = vld [vmem:[%s142 + $0x28] sm:$0xff]
        %v151 = vld [vmem:[%s142 + $0x30] sm:$0xff]
        %v152 = vld [vmem:[%s142 + $0x38] sm:$0xff]
        %v153 = vld [vmem:[%s142 + $0x40] sm:$0xff]
        %v154 = vld [vmem:[%s142 + $0x48] sm:$0xff]
        %v155 = vld [vmem:[%s142 + $0x50] sm:$0xff]
        %v156 = vld [vmem:[%s142 + $0x58] sm:$0xff]
        %v157 = vld [vmem:[%s142 + $0x60] sm:$0xff]
        %v158 = vld [vmem:[%s142 + $0x68] sm:$0xff]
        %v159 = vld [vmem:[%s142 + $0x70] sm:$0xff]
        %v160 = vld [vmem:[%s142 + $0x78] sm:$0xff]
        %v161 = vld [vmem:[%s1] sm:$0xff]
        %v162 = vld [vmem:[%s1 + $0x8] sm:$0xff]
        %v163 = vld [vmem:[%s1 + $0x10] sm:$0xff]
        %v164 = vld [vmem:[%s1 + $0x18] sm:$0xff]
        %vm165 = vcmask 261120
        %v167 = vsel %vm165, %v145, 0
        %v170 = vsel %vm165, %v146, 0
        %v173 = vsel %vm165, %v147, 0
        %v176 = vsel %vm165, %v148, 0
        %v179 = vsel %vm165, %v149, 0
        %v182 = vsel %vm165, %v150, 0
        %v185 = vsel %vm165, %v151, 0
        %v188 = vsel %vm165, %v152, 0
        %v191 = vsel %vm165, %v153, 0
        %v194 = vsel %vm165, %v154, 0
        %v197 = vsel %vm165, %v155, 0
        %v200 = vsel %vm165, %v156, 0
        %v203 = vsel %vm165, %v157, 0
        %v206 = vsel %vm165, %v158, 0
        %v209 = vsel %vm165, %v159, 0
        %v212 = vsel %vm165, %v160, 0
        %214 = vmatpush.msra.mxu0 0.0
        %215 = vmatpush.msra.mxu0 0.0
        %216 = vmatpush.msra.mxu0 0.0
        %217 = vmatpush.msra.mxu0 0.0
        %218 = vmatpush.msra.mxu0 0.0
        %219 = vmatpush.msra.mxu0 0.0
        %220 = vmatpush.msra.mxu0 0.0
        %221 = vmatpush.msra.mxu0 0.0
        %222 = vmatpush.msra.mxu0 0.0
        %223 = vmatpush.msra.mxu0 0.0
        %224 = vmatpush.msra.mxu0 0.0
        %225 = vmatpush.msra.mxu0 0.0
        %226 = vmatpush.msra.mxu0 %v164
        %227 = vmatpush.msra.mxu0 %v163
        %228 = vmatpush.msra.mxu0 %v162
        %229 = vmatpush.msra.mxu0 %v161
        %230 = vmatmul.f32.gmra.mxu0 %v167
        %v231 = vpop.f32.mrf.mxu0
        %v232 = vadd.f32 0.0, %v231
        %233 = vmatmul.f32.gmra.mxu0 %v170
        %v234 = vpop.f32.mrf.mxu0
        %v235 = vadd.f32 0.0, %v234
        %236 = vmatmul.f32.gmra.mxu0 %v173
        %v237 = vpop.f32.mrf.mxu0
        %v238 = vadd.f32 0.0, %v237
        %239 = vmatmul.f32.gmra.mxu0 %v176
        %v240 = vpop.f32.mrf.mxu0
        %v241 = vadd.f32 0.0, %v240
        %242 = vmatmul.f32.gmra.mxu0 %v179
        %v243 = vpop.f32.mrf.mxu0
        %v244 = vadd.f32 0.0, %v243
        %245 = vmatmul.f32.gmra.mxu0 %v182
        %v246 = vpop.f32.mrf.mxu0
        %v247 = vadd.f32 0.0, %v246
        %248 = vmatmul.f32.gmra.mxu0 %v185
        %v249 = vpop.f32.mrf.mxu0
        %v250 = vadd.f32 0.0, %v249
        %251 = vmatmul.f32.gmra.mxu0 %v188
        %v252 = vpop.f32.mrf.mxu0
        %v253 = vadd.f32 0.0, %v252
        %254 = vmatmul.f32.gmra.mxu0 %v191
        %v255 = vpop.f32.mrf.mxu0
        %v256 = vadd.f32 0.0, %v255
        %257 = vmatmul.f32.gmra.mxu0 %v194
        %v258 = vpop.f32.mrf.mxu0
        %v259 = vadd.f32 0.0, %v258
        %260 = vmatmul.f32.gmra.mxu0 %v197
        %v261 = vpop.f32.mrf.mxu0
        %v262 = vadd.f32 0.0, %v261
        %263 = vmatmul.f32.gmra.mxu0 %v200
        %v264 = vpop.f32.mrf.mxu0
        %v265 = vadd.f32 0.0, %v264
        %266 = vmatmul.f32.gmra.mxu0 %v203
        %v267 = vpop.f32.mrf.mxu0
        %v268 = vadd.f32 0.0, %v267
        %269 = vmatmul.f32.gmra.mxu0 %v206
        %v270 = vpop.f32.mrf.mxu0
        %v271 = vadd.f32 0.0, %v270
        %272 = vmatmul.f32.gmra.mxu0 %v209
        %v273 = vpop.f32.mrf.mxu0
        %v274 = vadd.f32 0.0, %v273
        %275 = vmatmul.f32.gmra.mxu0 %v212
        %v276 = vpop.f32.mrf.mxu0
        %v277 = vadd.f32 0.0, %v276
        %278 = vdwg.mxu0
        %v279 = vpack.c.bf16 %v232, %v232
        %v280 = vpack.c.bf16 %v235, %v235
        %v281 = vpack.c.bf16 %v238, %v238
        %v282 = vpack.c.bf16 %v241, %v241
        %v283 = vpack.c.bf16 %v244, %v244
        %v284 = vpack.c.bf16 %v247, %v247
        %v285 = vpack.c.bf16 %v250, %v250
        %v286 = vpack.c.bf16 %v253, %v253
        %v287 = vpack.c.bf16 %v256, %v256
        %v288 = vpack.c.bf16 %v259, %v259
        %v289 = vpack.c.bf16 %v262, %v262
        %v290 = vpack.c.bf16 %v265, %v265
        %v291 = vpack.c.bf16 %v268, %v268
        %v292 = vpack.c.bf16 %v271, %v271
        %v293 = vpack.c.bf16 %v274, %v274
        %v294 = vpack.c.bf16 %v277, %v277
        %295 = vst [vmem:[%s137] sm:$0xf] %v279
        %296 = vst [vmem:[%s137 + $0x4] sm:$0xf] %v280
        %297 = vst [vmem:[%s137 + $0x8] sm:$0xf] %v281
        %298 = vst [vmem:[%s137 + $0xc] sm:$0xf] %v282
        %299 = vst [vmem:[%s137 + $0x10] sm:$0xf] %v283
        %300 = vst [vmem:[%s137 + $0x14] sm:$0xf] %v284
        %301 = vst [vmem:[%s137 + $0x18] sm:$0xf] %v285
        %302 = vst [vmem:[%s137 + $0x1c] sm:$0xf] %v286
        %303 = vst [vmem:[%s137 + $0x20] sm:$0xf] %v287
        %304 = vst [vmem:[%s137 + $0x24] sm:$0xf] %v288
        %305 = vst [vmem:[%s137 + $0x28] sm:$0xf] %v289
        %306 = vst [vmem:[%s137 + $0x2c] sm:$0xf] %v290
        %307 = vst [vmem:[%s137 + $0x30] sm:$0xf] %v291
        %308 = vst [vmem:[%s137 + $0x34] sm:$0xf] %v292
        %309 = vst [vmem:[%s137 + $0x38] sm:$0xf] %v293
        %310 = vst [vmem:[%s137 + $0x3c] sm:$0xf] %v294
        %s311 = sand.u32 %s71, 1
        %s312 = scalar_lea.sflag [#allocation3], %s311
        %s313 = sand.u32 %s71, 1
        %s314 = smul.addr %s313, 64
        %s315 = scalar_lea.vmem [#allocation2], %s314
        // Predicated region
        $region29: #{tpu_custom_call.1} parent=27 // pred_check
          %p316 = pneg %p81
        $region30: #{tpu_custom_call.1} parent=27 // pred_check_branch
          %318 = sbr.rel (%p316) target = $region32
        $region31: #{tpu_custom_call.1} parent=27 // pred_region
          %s319 = smul.u32 16, %s16
          %321 = vsyncadd %s312, 0
          %s322 = smul.addr %s319, 4
          %s323 = scalar_lea.hbm %s2, %s322
          %s324 = sshll.u32 %s315, 4
          %s325 = int_to_ptr.vmem [resolvable:$true] %s324
          %s326 = sshll.u32 %s323, 4
          %s327 = int_to_ptr.hbm [resolvable:$true] %s326
          %332 = dma.vmem_to_hbm [thread:$0]  %s325, 1024, %s327, %s312, 64, 64, 4
        $region32: #{tpu_custom_call.1} parent=27 // pred_fallthru
          _
      $region28: #{tpu_custom_call.1} parent=5 // pred_fallthru
        _
      %p333 = scmp.le.s32.totalorder 2, %s11
      // Predicated region
      $region33: #{tpu_custom_call.1} parent=5 // pred_check
        %p334 = pneg %p333
      $region34: #{tpu_custom_call.1} parent=5 // pred_check_branch
        %336 = sbr.rel (%p334) target = $region36
      $region35: #{tpu_custom_call.1} parent=5 // pred_region
        %s337 = ssub.s32 %s11, 2
        // Predicated region
        $region37: #{tpu_custom_call.1} parent=35 // pred_check
          %p338 = pneg %p87
        $region38: #{tpu_custom_call.1} parent=35 // pred_check_branch
          %340 = sbr.rel (%p338) target = $region40
        $region39: #{tpu_custom_call.1} parent=35 // pred_region
          %s341 = sand.u32 %s72, 1
          %s342 = scalar_lea.sflag [#allocation3], %s341
          %s343 = sand.u32 %s72, 1
          %s344 = smul.addr %s343, 64
          %s345 = scalar_lea.vmem [#allocation2], %s344
          %347 = dma.done %s342, 1024
        $region40: #{tpu_custom_call.1} parent=35 // pred_fallthru
          _
      $region36: #{tpu_custom_call.1} parent=5 // pred_fallthru
        _
    $region6: #{tpu_custom_call.1} parent=1 // loop_footer
      %s15 = sadd.s32 1, %s11
    $region7: #{tpu_custom_call.1} parent=1 // loop_footer_branch
      %10 = sbr.rel target = $region3
    $region8: #{tpu_custom_call.1} parent=1 // loop_exit
      _
    %348 = vsyncpa [#allocation3], 1
    %s349 = scalar_lea.sflag [#allocation3], 1
    %350 = vsyncpa %s349, 1

</llo_original>
